<compile_context>
chip_gen: v5e
topology: v5e:2x2
jax: 0.10.0
libtpu: 0.0.40
codegen_flags: <defaults>
</compile_context>

<pallas_src>
import functools

import jax
import jax.numpy as jnp
from jax.experimental import pallas as pl
from jax.experimental.pallas import tpu as pltpu


def _round_up(x, m):
    return ((x + m - 1) // m) * m


def premodel_kernel(
    o0_ref, o1_ref, o2_ref, o3_ref, o4_ref, o5_ref,   # [TB, D] each
    o6_ref,                                           # [TB, E]
    wp_ref, bp_ref,                                   # [6, D, h0], [6, h0]
    wr_ref, br_ref,                                   # [5*h0, h1], [1, h1]
    wact_ref, wres_ref, wobs_ref, ball_ref,           # [h0,h2],[h1,h2],[E,h2],[1,h2]
    out_ref,                                          # [TB, h2]
    *, h0, compute_dtype,
):
    f32 = jnp.float32
    poke_refs = (o0_ref, o1_ref, o2_ref, o3_ref, o4_ref, o5_ref)

    def poke_branch(j):
        # ReLU(obs_j @ W_j + b_j): bf16/f32 MXU inputs, f32 accumulation & bias.
        x = poke_refs[j][...].astype(compute_dtype)
        pre = jnp.dot(x, wp_ref[j], preferred_element_type=f32)
        return jnp.maximum(pre + bp_ref[j:j + 1, :], 0.0).astype(compute_dtype)

    # Active pokemon branch (feeds layer 3 directly).
    act = poke_branch(0)                                         # [TB, h0]

    # Reserved branches: each branch's layer-2 contribution is accumulated
    # directly -> torch.cat(r1..r5) @ Wr without ever forming the concat.
    pre2 = jnp.dot(poke_branch(1), wr_ref[0:h0, :], preferred_element_type=f32)
    for j in range(2, 6):
        pre2 = pre2 + jnp.dot(poke_branch(j), wr_ref[(j - 1) * h0:j * h0, :],
                              preferred_element_type=f32)
    reserved = jnp.maximum(pre2 + br_ref[...], 0.0).astype(compute_dtype)

    # Layer 3: ReLU(act @ Wact + reserved @ Wres + obs6 @ Wobs + ball)
    # (== ReLU(concat([act, reserved, obs6]) @ Wall + ball)).
    acc = jnp.dot(act, wact_ref[...], preferred_element_type=f32)
    acc = acc + jnp.dot(reserved, wres_ref[...], preferred_element_type=f32)
    acc = acc + jnp.dot(o6_ref[...].astype(compute_dtype), wobs_ref[...],
                        preferred_element_type=f32)
    out_ref[...] = jnp.maximum(acc + ball_ref[...], 0.0).astype(out_ref.dtype)


def pack_params(params, hidden_sizes, compute_dtype=jnp.bfloat16):
    """Repack the per-layer Linear params for the kernel (done once at load).

    Weights are cast to `compute_dtype` (MXU operand dtype); biases stay f32
    and are added after the f32 accumulation.  compute_dtype=float32 is
    bit-compatible with the PyTorch module; bfloat16 (default) halves weight /
    operand traffic with f32 accumulation (not bit-compatible).
    """
    h0, h1, h2 = hidden_sizes
    ws = [params["wa"]] + [params[f"w{i}"] for i in range(1, 6)]
    bs = [params["ba"]] + [params[f"b{i}"] for i in range(1, 6)]
    wall = params["wall"]
    assert params["wr"].shape[0] == 5 * h0 and params["wr"].shape[1] == h1
    assert wall.shape[1] == h2 and wall.shape[0] > h0 + h1
    return {
        "wp": jnp.stack(ws, axis=0).astype(compute_dtype),        # [6, D, h0]
        "bp": jnp.concatenate(bs, axis=0).astype(jnp.float32),    # [6, h0]
        "wr": params["wr"].astype(compute_dtype),                 # [5*h0, h1]
        "br": params["br"].astype(jnp.float32),                   # [1, h1]
        "wact": wall[:h0, :].astype(compute_dtype),               # [h0, h2]
        "wres": wall[h0:h0 + h1, :].astype(compute_dtype),        # [h1, h2]
        "wobs": wall[h0 + h1:, :].astype(compute_dtype),          # [E, h2]
        "ball": params["ball"].astype(jnp.float32),               # [1, h2]
    }


def base_pre_model_forward(obs, packed, hidden_sizes, *, tile_b=2048,
                           out_dtype=None):
    """obs: list of 7 arrays (obs[0..5]: [B, D_poke], obs[6]: [B, E])."""
    h0, h1, h2 = hidden_sizes
    assert isinstance(obs, (list, tuple)) and len(obs) == 7
    B, D = obs[0].shape
    E = obs[6].shape[1]
    compute_dtype = packed["wp"].dtype
    if out_dtype is None:
        out_dtype = obs[0].dtype

    # Batch tile: multiple of 8 sublanes.  Ragged batches are handled by a
    # cdiv grid with a partial last block (no jnp.pad copy through HBM).
    tb = min(_round_up(tile_b, 8), _round_up(B, 8))
    if B > 8:
        # Allow >= 2 grid steps where possible so the "parallel" batch axis can
        # shard across the two TensorCores on v7x-class parts.
        tb = min(tb, _round_up(pl.cdiv(B, 2), 8))
    tb = max(tb, 8)
    grid = (pl.cdiv(B, tb),)

    def row_spec(feat):
        return pl.BlockSpec((tb, feat), lambda i: (i, 0))

    def const_spec(arr):
        # Full-array block, constant index_map -> VMEM-resident across tiles.
        nd = arr.ndim
        return pl.BlockSpec(arr.shape, lambda i, _n=nd: (0,) * _n)

    weights = (packed["wp"], packed["bp"], packed["wr"], packed["br"],
               packed["wact"], packed["wres"], packed["wobs"], packed["ball"])

    # Advisory cost estimate so XLA can schedule/overlap the surrounding ops.
    flops = 2 * B * (6 * D * h0 + 5 * h0 * h1 + (h0 + h1 + E) * h2)
    bytes_accessed = (
        sum(int(o.size) * o.dtype.itemsize for o in obs)
        + sum(int(w.size) * w.dtype.itemsize for w in weights)
        + B * h2 * jnp.dtype(out_dtype).itemsize)

    kernel = functools.partial(premodel_kernel, h0=h0,
                               compute_dtype=compute_dtype)

    return pl.pallas_call(
        kernel,
        out_shape=jax.ShapeDtypeStruct((B, h2), out_dtype),
        grid=grid,
        in_specs=[row_spec(D)] * 6 + [row_spec(E)]
                 + [const_spec(w) for w in weights],
        out_specs=pl.BlockSpec((tb, h2), lambda i: (i, 0)),
        compiler_params=pltpu.CompilerParams(
            dimension_semantics=("parallel",),
            vmem_limit_bytes=32 * 1024 * 1024),
        cost_estimate=pl.CostEstimate(flops=flops, transcendentals=0,
                                      bytes_accessed=bytes_accessed),
    )(*obs, *weights)


def init_linear(key, fan_in, fan_out):
    """PyTorch-style nn.Linear init: U(-1/sqrt(fan_in), 1/sqrt(fan_in)).
    Weight stored as [in, out] (transposed vs. torch)."""
    kw, kb = jax.random.split(key)
    bound = 1.0 / jnp.sqrt(jnp.float32(fan_in))
    w = jax.random.uniform(kw, (fan_in, fan_out), jnp.float32, -bound, bound)
    b = jax.random.uniform(kb, (1, fan_out), jnp.float32, -bound, bound)
    return w, b


def reference_forward(obs, params):
    """Plain-JAX reference (mirrors the PyTorch module exactly)."""
    def dr(x, w, b):
        return jnp.maximum(x @ w + b, 0.0)
    act = dr(obs[0], params["wa"], params["ba"])
    rs = [dr(obs[i + 1], params[f"w{i + 1}"], params[f"b{i + 1}"]) for i in range(5)]
    reserved = dr(jnp.concatenate(rs, axis=-1), params["wr"], params["br"])
    all_cat = jnp.concatenate([act, reserved, obs[6]], axis=-1)
    return dr(all_cat, params["wall"], params["ball"])


if __name__ == "__main__":
    hidden_sizes = (32, 64, 32)
    total_poke_obs_dim = 24
    others_obs_dim = 16
    h0, h1, h2 = hidden_sizes

    key = jax.random.PRNGKey(0)
    keys = jax.random.split(key, 16)

    params = {}
    params["wa"], params["ba"] = init_linear(keys[7], total_poke_obs_dim, h0)
    for i in range(5):
        params[f"w{i + 1}"], params[f"b{i + 1}"] = init_linear(
            keys[8 + i], total_poke_obs_dim, h0)
    params["wr"], params["br"] = init_linear(keys[13], h0 * 5, h1)
    params["wall"], params["ball"] = init_linear(
        keys[14], h0 + h1 + others_obs_dim, h2)

    def make_obs(batch, k):
        ks = jax.random.split(k, 7)
        o = [jax.random.normal(ks[i], (batch, total_poke_obs_dim), jnp.float32)
             for i in range(6)]
        o.append(jax.random.normal(ks[6], (batch, others_obs_dim), jnp.float32))
        return o

    packed_f32 = pack_params(params, hidden_sizes, compute_dtype=jnp.float32)
    packed_bf16 = pack_params(params, hidden_sizes)   # default bf16 fast path

    # Case 1: small single-tile batch, exact f32 check vs. the reference.
    obs = make_obs(8, keys[0])
    out = jax.block_until_ready(base_pre_model_forward(obs, packed_f32, hidden_sizes))
    ref = reference_forward(obs, params)
    assert out.shape == (8, h2) and out.dtype == jnp.float32
    assert jnp.allclose(out, ref, atol=1e-5, rtol=1e-5), "f32 mismatch vs reference"

    # Case 2: ragged batch (B=20, tb=8) -> grid=(3,), partial last block, no pad copy.
    obs2 = make_obs(20, keys[1])
    out2 = jax.block_until_ready(
        base_pre_model_forward(obs2, packed_f32, hidden_sizes, tile_b=8))
    ref2 = reference_forward(obs2, params)
    assert out2.shape == (20, h2)
    assert jnp.allclose(out2, ref2, atol=1e-5, rtol=1e-5), "ragged-grid f32 mismatch"

    # Case 3: default bf16 fast path (bf16 weights/operands, f32 accumulation).
    out3 = jax.block_until_ready(base_pre_model_forward(obs, packed_bf16, hidden_sizes))
    assert out3.shape == (8, h2)
    assert bool(jnp.all(jnp.isfinite(out3)))
    assert jnp.allclose(out3, ref, atol=0.1, rtol=0.1), "bf16 path diverged too far"

    print("KERNEL_OK")
</pallas_src>

<mosaic_0001>
module attributes {stable_mosaic.version = 11 : i64} {
  func.func @premodel_kernel(%arg0: i32, %arg1: memref<8x24xf32, #tpu.memory_space<vmem>>, %arg2: memref<8x24xf32, #tpu.memory_space<vmem>>, %arg3: memref<8x24xf32, #tpu.memory_space<vmem>>, %arg4: memref<8x24xf32, #tpu.memory_space<vmem>>, %arg5: memref<8x24xf32, #tpu.memory_space<vmem>>, %arg6: memref<8x24xf32, #tpu.memory_space<vmem>>, %arg7: memref<8x16xf32, #tpu.memory_space<vmem>>, %arg8: memref<6x24x32xf32, #tpu.memory_space<vmem>>, %arg9: memref<6x32xf32, #tpu.memory_space<vmem>>, %arg10: memref<160x64xf32, #tpu.memory_space<vmem>>, %arg11: memref<1x64xf32, #tpu.memory_space<vmem>>, %arg12: memref<32x32xf32, #tpu.memory_space<vmem>>, %arg13: memref<64x32xf32, #tpu.memory_space<vmem>>, %arg14: memref<16x32xf32, #tpu.memory_space<vmem>>, %arg15: memref<1x32xf32, #tpu.memory_space<vmem>>, %arg16: memref<8x32xf32, #tpu.memory_space<vmem>>) attributes {dimension_semantics = [#tpu.dimension_semantics<parallel>], iteration_bounds = array<i64: 1>, scalar_prefetch = 0 : i64, scratch_operands = 0 : i64, tpu.core_type = #tpu.core_type<tc>, window_params = [{transform_indices = @transform_0, window_bounds = array<i64: 8, 24>}, {transform_indices = @transform_1, window_bounds = array<i64: 8, 24>}, {transform_indices = @transform_2, window_bounds = array<i64: 8, 24>}, {transform_indices = @transform_3, window_bounds = array<i64: 8, 24>}, {transform_indices = @transform_4, window_bounds = array<i64: 8, 24>}, {transform_indices = @transform_5, window_bounds = array<i64: 8, 24>}, {transform_indices = @transform_6, window_bounds = array<i64: 8, 16>}, {pipeline_mode = #tpu.pipeline_mode<synchronous>, transform_indices = @transform_7, window_bounds = array<i64: 6, 24, 32>}, {pipeline_mode = #tpu.pipeline_mode<synchronous>, transform_indices = @transform_8, window_bounds = array<i64: 6, 32>}, {pipeline_mode = #tpu.pipeline_mode<synchronous>, transform_indices = @transform_9, window_bounds = array<i64: 160, 64>}, {pipeline_mode = #tpu.pipeline_mode<synchronous>, transform_indices = @transform_10, window_bounds = array<i64: 1, 64>}, {pipeline_mode = #tpu.pipeline_mode<synchronous>, transform_indices = @transform_11, window_bounds = array<i64: 32, 32>}, {pipeline_mode = #tpu.pipeline_mode<synchronous>, transform_indices = @transform_12, window_bounds = array<i64: 64, 32>}, {pipeline_mode = #tpu.pipeline_mode<synchronous>, transform_indices = @transform_13, window_bounds = array<i64: 16, 32>}, {pipeline_mode = #tpu.pipeline_mode<synchronous>, transform_indices = @transform_14, window_bounds = array<i64: 1, 32>}, {transform_indices = @transform_15, window_bounds = array<i64: 8, 32>}]} {
    %c0 = arith.constant 0 : index
    %c0_0 = arith.constant 0 : index
    %0 = vector.load %arg1[%c0, %c0_0] : memref<8x24xf32, #tpu.memory_space<vmem>>, vector<8x24xf32>
    %c0_1 = arith.constant 0 : index
    %c0_2 = arith.constant 0 : index
    %c0_3 = arith.constant 0 : index
    %1 = vector.load %arg8[%c0_1, %c0_2, %c0_3] : memref<6x24x32xf32, #tpu.memory_space<vmem>>, vector<1x24x32xf32>
    %2 = vector.shape_cast %1 : vector<1x24x32xf32> to vector<24x32xf32>
    %cst = arith.constant dense<0.000000e+00> : vector<8x32xf32>
    %3 = tpu.matmul %0, %2, %cst {dimension_numbers = #tpu.dot_dimension_numbers<[1], [0], [0], [1], [0, 0, 1, 1], [], []>} : vector<8x24xf32>, vector<24x32xf32>, vector<8x32xf32> -> vector<8x32xf32>
    %c0_4 = arith.constant 0 : index
    %c0_5 = arith.constant 0 : index
    %4 = vector.load %arg9[%c0_4, %c0_5] : memref<6x32xf32, #tpu.memory_space<vmem>>, vector<1x32xf32>
    %5 = vector.broadcast %4 : vector<1x32xf32> to vector<8x32xf32>
    %6 = arith.addf %3, %5 : vector<8x32xf32>
    %cst_6 = arith.constant 0.000000e+00 : f32
    %7 = vector.broadcast %cst_6 : f32 to vector<8x32xf32>
    %8 = arith.maximumf %6, %7 : vector<8x32xf32>
    %c0_7 = arith.constant 0 : index
    %c0_8 = arith.constant 0 : index
    %9 = vector.load %arg2[%c0_7, %c0_8] : memref<8x24xf32, #tpu.memory_space<vmem>>, vector<8x24xf32>
    %c1 = arith.constant 1 : index
    %c0_9 = arith.constant 0 : index
    %c0_10 = arith.constant 0 : index
    %10 = vector.load %arg8[%c1, %c0_9, %c0_10] : memref<6x24x32xf32, #tpu.memory_space<vmem>>, vector<1x24x32xf32>
    %11 = vector.shape_cast %10 : vector<1x24x32xf32> to vector<24x32xf32>
    %cst_11 = arith.constant dense<0.000000e+00> : vector<8x32xf32>
    %12 = tpu.matmul %9, %11, %cst_11 {dimension_numbers = #tpu.dot_dimension_numbers<[1], [0], [0], [1], [0, 0, 1, 1], [], []>} : vector<8x24xf32>, vector<24x32xf32>, vector<8x32xf32> -> vector<8x32xf32>
    %c1_12 = arith.constant 1 : index
    %c0_13 = arith.constant 0 : index
    %13 = vector.load %arg9[%c1_12, %c0_13] : memref<6x32xf32, #tpu.memory_space<vmem>>, vector<1x32xf32>
    %14 = vector.broadcast %13 : vector<1x32xf32> to vector<8x32xf32>
    %15 = arith.addf %12, %14 : vector<8x32xf32>
    %cst_14 = arith.constant 0.000000e+00 : f32
    %16 = vector.broadcast %cst_14 : f32 to vector<8x32xf32>
    %17 = arith.maximumf %15, %16 : vector<8x32xf32>
    %c0_15 = arith.constant 0 : index
    %c0_16 = arith.constant 0 : index
    %18 = vector.load %arg10[%c0_15, %c0_16] : memref<160x64xf32, #tpu.memory_space<vmem>>, vector<32x64xf32>
    %cst_17 = arith.constant dense<0.000000e+00> : vector<8x64xf32>
    %19 = tpu.matmul %17, %18, %cst_17 {dimension_numbers = #tpu.dot_dimension_numbers<[1], [0], [0], [1], [0, 0, 1, 1], [], []>} : vector<8x32xf32>, vector<32x64xf32>, vector<8x64xf32> -> vector<8x64xf32>
    %c0_18 = arith.constant 0 : index
    %c0_19 = arith.constant 0 : index
    %20 = vector.load %arg3[%c0_18, %c0_19] : memref<8x24xf32, #tpu.memory_space<vmem>>, vector<8x24xf32>
    %c2 = arith.constant 2 : index
    %c0_20 = arith.constant 0 : index
    %c0_21 = arith.constant 0 : index
    %21 = vector.load %arg8[%c2, %c0_20, %c0_21] : memref<6x24x32xf32, #tpu.memory_space<vmem>>, vector<1x24x32xf32>
    %22 = vector.shape_cast %21 : vector<1x24x32xf32> to vector<24x32xf32>
    %cst_22 = arith.constant dense<0.000000e+00> : vector<8x32xf32>
    %23 = tpu.matmul %20, %22, %cst_22 {dimension_numbers = #tpu.dot_dimension_numbers<[1], [0], [0], [1], [0, 0, 1, 1], [], []>} : vector<8x24xf32>, vector<24x32xf32>, vector<8x32xf32> -> vector<8x32xf32>
    %c2_23 = arith.constant 2 : index
    %c0_24 = arith.constant 0 : index
    %24 = vector.load %arg9[%c2_23, %c0_24] : memref<6x32xf32, #tpu.memory_space<vmem>>, vector<1x32xf32>
    %25 = vector.broadcast %24 : vector<1x32xf32> to vector<8x32xf32>
    %26 = arith.addf %23, %25 : vector<8x32xf32>
    %cst_25 = arith.constant 0.000000e+00 : f32
    %27 = vector.broadcast %cst_25 : f32 to vector<8x32xf32>
    %28 = arith.maximumf %26, %27 : vector<8x32xf32>
    %c32 = arith.constant 32 : index
    %c0_26 = arith.constant 0 : index
    %29 = vector.load %arg10[%c32, %c0_26] : memref<160x64xf32, #tpu.memory_space<vmem>>, vector<32x64xf32>
    %cst_27 = arith.constant dense<0.000000e+00> : vector<8x64xf32>
    %30 = tpu.matmul %28, %29, %cst_27 {dimension_numbers = #tpu.dot_dimension_numbers<[1], [0], [0], [1], [0, 0, 1, 1], [], []>} : vector<8x32xf32>, vector<32x64xf32>, vector<8x64xf32> -> vector<8x64xf32>
    %31 = arith.addf %19, %30 : vector<8x64xf32>
    %c0_28 = arith.constant 0 : index
    %c0_29 = arith.constant 0 : index
    %32 = vector.load %arg4[%c0_28, %c0_29] : memref<8x24xf32, #tpu.memory_space<vmem>>, vector<8x24xf32>
    %c3 = arith.constant 3 : index
    %c0_30 = arith.constant 0 : index
    %c0_31 = arith.constant 0 : index
    %33 = vector.load %arg8[%c3, %c0_30, %c0_31] : memref<6x24x32xf32, #tpu.memory_space<vmem>>, vector<1x24x32xf32>
    %34 = vector.shape_cast %33 : vector<1x24x32xf32> to vector<24x32xf32>
    %cst_32 = arith.constant dense<0.000000e+00> : vector<8x32xf32>
    %35 = tpu.matmul %32, %34, %cst_32 {dimension_numbers = #tpu.dot_dimension_numbers<[1], [0], [0], [1], [0, 0, 1, 1], [], []>} : vector<8x24xf32>, vector<24x32xf32>, vector<8x32xf32> -> vector<8x32xf32>
    %c3_33 = arith.constant 3 : index
    %c0_34 = arith.constant 0 : index
    %36 = vector.load %arg9[%c3_33, %c0_34] : memref<6x32xf32, #tpu.memory_space<vmem>>, vector<1x32xf32>
    %37 = vector.broadcast %36 : vector<1x32xf32> to vector<8x32xf32>
    %38 = arith.addf %35, %37 : vector<8x32xf32>
    %cst_35 = arith.constant 0.000000e+00 : f32
    %39 = vector.broadcast %cst_35 : f32 to vector<8x32xf32>
    %40 = arith.maximumf %38, %39 : vector<8x32xf32>
    %c64 = arith.constant 64 : index
    %c0_36 = arith.constant 0 : index
    %41 = vector.load %arg10[%c64, %c0_36] : memref<160x64xf32, #tpu.memory_space<vmem>>, vector<32x64xf32>
    %cst_37 = arith.constant dense<0.000000e+00> : vector<8x64xf32>
    %42 = tpu.matmul %40, %41, %cst_37 {dimension_numbers = #tpu.dot_dimension_numbers<[1], [0], [0], [1], [0, 0, 1, 1], [], []>} : vector<8x32xf32>, vector<32x64xf32>, vector<8x64xf32> -> vector<8x64xf32>
    %43 = arith.addf %31, %42 : vector<8x64xf32>
    %c0_38 = arith.constant 0 : index
    %c0_39 = arith.constant 0 : index
    %44 = vector.load %arg5[%c0_38, %c0_39] : memref<8x24xf32, #tpu.memory_space<vmem>>, vector<8x24xf32>
    %c4 = arith.constant 4 : index
    %c0_40 = arith.constant 0 : index
    %c0_41 = arith.constant 0 : index
    %45 = vector.load %arg8[%c4, %c0_40, %c0_41] : memref<6x24x32xf32, #tpu.memory_space<vmem>>, vector<1x24x32xf32>
    %46 = vector.shape_cast %45 : vector<1x24x32xf32> to vector<24x32xf32>
    %cst_42 = arith.constant dense<0.000000e+00> : vector<8x32xf32>
    %47 = tpu.matmul %44, %46, %cst_42 {dimension_numbers = #tpu.dot_dimension_numbers<[1], [0], [0], [1], [0, 0, 1, 1], [], []>} : vector<8x24xf32>, vector<24x32xf32>, vector<8x32xf32> -> vector<8x32xf32>
    %c4_43 = arith.constant 4 : index
    %c0_44 = arith.constant 0 : index
    %48 = vector.load %arg9[%c4_43, %c0_44] : memref<6x32xf32, #tpu.memory_space<vmem>>, vector<1x32xf32>
    %49 = vector.broadcast %48 : vector<1x32xf32> to vector<8x32xf32>
    %50 = arith.addf %47, %49 : vector<8x32xf32>
    %cst_45 = arith.constant 0.000000e+00 : f32
    %51 = vector.broadcast %cst_45 : f32 to vector<8x32xf32>
    %52 = arith.maximumf %50, %51 : vector<8x32xf32>
    %c96 = arith.constant 96 : index
    %c0_46 = arith.constant 0 : index
    %53 = vector.load %arg10[%c96, %c0_46] : memref<160x64xf32, #tpu.memory_space<vmem>>, vector<32x64xf32>
    %cst_47 = arith.constant dense<0.000000e+00> : vector<8x64xf32>
    %54 = tpu.matmul %52, %53, %cst_47 {dimension_numbers = #tpu.dot_dimension_numbers<[1], [0], [0], [1], [0, 0, 1, 1], [], []>} : vector<8x32xf32>, vector<32x64xf32>, vector<8x64xf32> -> vector<8x64xf32>
    %55 = arith.addf %43, %54 : vector<8x64xf32>
    %c0_48 = arith.constant 0 : index
    %c0_49 = arith.constant 0 : index
    %56 = vector.load %arg6[%c0_48, %c0_49] : memref<8x24xf32, #tpu.memory_space<vmem>>, vector<8x24xf32>
    %c5 = arith.constant 5 : index
    %c0_50 = arith.constant 0 : index
    %c0_51 = arith.constant 0 : index
    %57 = vector.load %arg8[%c5, %c0_50, %c0_51] : memref<6x24x32xf32, #tpu.memory_space<vmem>>, vector<1x24x32xf32>
    %58 = vector.shape_cast %57 : vector<1x24x32xf32> to vector<24x32xf32>
    %cst_52 = arith.constant dense<0.000000e+00> : vector<8x32xf32>
    %59 = tpu.matmul %56, %58, %cst_52 {dimension_numbers = #tpu.dot_dimension_numbers<[1], [0], [0], [1], [0, 0, 1, 1], [], []>} : vector<8x24xf32>, vector<24x32xf32>, vector<8x32xf32> -> vector<8x32xf32>
    %c5_53 = arith.constant 5 : index
    %c0_54 = arith.constant 0 : index
    %60 = vector.load %arg9[%c5_53, %c0_54] : memref<6x32xf32, #tpu.memory_space<vmem>>, vector<1x32xf32>
    %61 = vector.broadcast %60 : vector<1x32xf32> to vector<8x32xf32>
    %62 = arith.addf %59, %61 : vector<8x32xf32>
    %cst_55 = arith.constant 0.000000e+00 : f32
    %63 = vector.broadcast %cst_55 : f32 to vector<8x32xf32>
    %64 = arith.maximumf %62, %63 : vector<8x32xf32>
    %c128 = arith.constant 128 : index
    %c0_56 = arith.constant 0 : index
    %65 = vector.load %arg10[%c128, %c0_56] : memref<160x64xf32, #tpu.memory_space<vmem>>, vector<32x64xf32>
    %cst_57 = arith.constant dense<0.000000e+00> : vector<8x64xf32>
    %66 = tpu.matmul %64, %65, %cst_57 {dimension_numbers = #tpu.dot_dimension_numbers<[1], [0], [0], [1], [0, 0, 1, 1], [], []>} : vector<8x32xf32>, vector<32x64xf32>, vector<8x64xf32> -> vector<8x64xf32>
    %67 = arith.addf %55, %66 : vector<8x64xf32>
    %c0_58 = arith.constant 0 : index
    %c0_59 = arith.constant 0 : index
    %68 = vector.load %arg11[%c0_58, %c0_59] : memref<1x64xf32, #tpu.memory_space<vmem>>, vector<1x64xf32>
    %69 = vector.broadcast %68 : vector<1x64xf32> to vector<8x64xf32>
    %70 = arith.addf %67, %69 : vector<8x64xf32>
    %cst_60 = arith.constant 0.000000e+00 : f32
    %71 = vector.broadcast %cst_60 : f32 to vector<8x64xf32>
    %72 = arith.maximumf %70, %71 : vector<8x64xf32>
    %c0_61 = arith.constant 0 : index
    %c0_62 = arith.constant 0 : index
    %73 = vector.load %arg12[%c0_61, %c0_62] : memref<32x32xf32, #tpu.memory_space<vmem>>, vector<32x32xf32>
    %cst_63 = arith.constant dense<0.000000e+00> : vector<8x32xf32>
    %74 = tpu.matmul %8, %73, %cst_63 {dimension_numbers = #tpu.dot_dimension_numbers<[1], [0], [0], [1], [0, 0, 1, 1], [], []>} : vector<8x32xf32>, vector<32x32xf32>, vector<8x32xf32> -> vector<8x32xf32>
    %c0_64 = arith.constant 0 : index
    %c0_65 = arith.constant 0 : index
    %75 = vector.load %arg13[%c0_64, %c0_65] : memref<64x32xf32, #tpu.memory_space<vmem>>, vector<64x32xf32>
    %cst_66 = arith.constant dense<0.000000e+00> : vector<8x32xf32>
    %76 = tpu.matmul %72, %75, %cst_66 {dimension_numbers = #tpu.dot_dimension_numbers<[1], [0], [0], [1], [0, 0, 1, 1], [], []>} : vector<8x64xf32>, vector<64x32xf32>, vector<8x32xf32> -> vector<8x32xf32>
    %77 = arith.addf %74, %76 : vector<8x32xf32>
    %c0_67 = arith.constant 0 : index
    %c0_68 = arith.constant 0 : index
    %78 = vector.load %arg7[%c0_67, %c0_68] : memref<8x16xf32, #tpu.memory_space<vmem>>, vector<8x16xf32>
    %c0_69 = arith.constant 0 : index
    %c0_70 = arith.constant 0 : index
    %79 = vector.load %arg14[%c0_69, %c0_70] : memref<16x32xf32, #tpu.memory_space<vmem>>, vector<16x32xf32>
    %cst_71 = arith.constant dense<0.000000e+00> : vector<8x32xf32>
    %80 = tpu.matmul %78, %79, %cst_71 {dimension_numbers = #tpu.dot_dimension_numbers<[1], [0], [0], [1], [0, 0, 1, 1], [], []>} : vector<8x16xf32>, vector<16x32xf32>, vector<8x32xf32> -> vector<8x32xf32>
    %81 = arith.addf %77, %80 : vector<8x32xf32>
    %c0_72 = arith.constant 0 : index
    %c0_73 = arith.constant 0 : index
    %82 = vector.load %arg15[%c0_72, %c0_73] : memref<1x32xf32, #tpu.memory_space<vmem>>, vector<1x32xf32>
    %83 = vector.broadcast %82 : vector<1x32xf32> to vector<8x32xf32>
    %84 = arith.addf %81, %83 : vector<8x32xf32>
    %cst_74 = arith.constant 0.000000e+00 : f32
    %85 = vector.broadcast %cst_74 : f32 to vector<8x32xf32>
    %86 = arith.maximumf %84, %85 : vector<8x32xf32>
    %c0_75 = arith.constant 0 : index
    %c0_76 = arith.constant 0 : index
    %87 = vector.load %arg16[%c0_75, %c0_76] : memref<8x32xf32, #tpu.memory_space<vmem>>, vector<8x32xf32>
    tpu.vector_store %arg16[%c0_75, %c0_76], %86 {strides = array<i32>} : memref<8x32xf32, #tpu.memory_space<vmem>>, vector<8x32xf32>,
    return
  }
  func.func @transform_0(%arg0: i32) -> (i32, i32) {
    %c0_i32 = arith.constant 0 : i32
    %c0_i32_0 = arith.constant 0 : i32
    return %arg0, %c0_i32 : i32, i32
  }
  func.func @transform_1(%arg0: i32) -> (i32, i32) {
    %c0_i32 = arith.constant 0 : i32
    %c0_i32_0 = arith.constant 0 : i32
    return %arg0, %c0_i32 : i32, i32
  }
  func.func @transform_2(%arg0: i32) -> (i32, i32) {
    %c0_i32 = arith.constant 0 : i32
    %c0_i32_0 = arith.constant 0 : i32
    return %arg0, %c0_i32 : i32, i32
  }
  func.func @transform_3(%arg0: i32) -> (i32, i32) {
    %c0_i32 = arith.constant 0 : i32
    %c0_i32_0 = arith.constant 0 : i32
    return %arg0, %c0_i32 : i32, i32
  }
  func.func @transform_4(%arg0: i32) -> (i32, i32) {
    %c0_i32 = arith.constant 0 : i32
    %c0_i32_0 = arith.constant 0 : i32
    return %arg0, %c0_i32 : i32, i32
  }
  func.func @transform_5(%arg0: i32) -> (i32, i32) {
    %c0_i32 = arith.constant 0 : i32
    %c0_i32_0 = arith.constant 0 : i32
    return %arg0, %c0_i32 : i32, i32
  }
  func.func @transform_6(%arg0: i32) -> (i32, i32) {
    %c0_i32 = arith.constant 0 : i32
    %c0_i32_0 = arith.constant 0 : i32
    return %arg0, %c0_i32 : i32, i32
  }
  func.func @transform_7(%arg0: i32) -> (i32, i32, i32) {
    %c0_i32 = arith.constant 0 : i32
    %c0_i32_0 = arith.constant 0 : i32
    %c0_i32_1 = arith.constant 0 : i32
    %c0_i32_2 = arith.constant 0 : i32
    return %c0_i32, %c0_i32_0, %c0_i32_1 : i32, i32, i32
  }
  func.func @transform_8(%arg0: i32) -> (i32, i32) {
    %c0_i32 = arith.constant 0 : i32
    %c0_i32_0 = arith.constant 0 : i32
    %c0_i32_1 = arith.constant 0 : i32
    return %c0_i32, %c0_i32_0 : i32, i32
  }
  func.func @transform_9(%arg0: i32) -> (i32, i32) {
    %c0_i32 = arith.constant 0 : i32
    %c0_i32_0 = arith.constant 0 : i32
    %c0_i32_1 = arith.constant 0 : i32
    return %c0_i32, %c0_i32_0 : i32, i32
  }
  func.func @transform_10(%arg0: i32) -> (i32, i32) {
    %c0_i32 = arith.constant 0 : i32
    %c0_i32_0 = arith.constant 0 : i32
    %c0_i32_1 = arith.constant 0 : i32
    return %c0_i32, %c0_i32_0 : i32, i32
  }
  func.func @transform_11(%arg0: i32) -> (i32, i32) {
    %c0_i32 = arith.constant 0 : i32
    %c0_i32_0 = arith.constant 0 : i32
    %c0_i32_1 = arith.constant 0 : i32
    return %c0_i32, %c0_i32_0 : i32, i32
  }
  func.func @transform_12(%arg0: i32) -> (i32, i32) {
    %c0_i32 = arith.constant 0 : i32
    %c0_i32_0 = arith.constant 0 : i32
    %c0_i32_1 = arith.constant 0 : i32
    return %c0_i32, %c0_i32_0 : i32, i32
  }
  func.func @transform_13(%arg0: i32) -> (i32, i32) {
    %c0_i32 = arith.constant 0 : i32
    %c0_i32_0 = arith.constant 0 : i32
    %c0_i32_1 = arith.constant 0 : i32
    return %c0_i32, %c0_i32_0 : i32, i32
  }
  func.func @transform_14(%arg0: i32) -> (i32, i32) {
    %c0_i32 = arith.constant 0 : i32
    %c0_i32_0 = arith.constant 0 : i32
    %c0_i32_1 = arith.constant 0 : i32
    return %c0_i32, %c0_i32_0 : i32, i32
  }
  func.func @transform_15(%arg0: i32) -> (i32, i32) {
    %c0_i32 = arith.constant 0 : i32
    %c0_i32_0 = arith.constant 0 : i32
    return %arg0, %c0_i32 : i32, i32
  }
}

</mosaic_0001>

<llo_original>
// kernel: tpu_custom_call.1
$region0: #{tpu_custom_call.1}
  #allocation0 [shape = 'u32[]', space=smem, size = 0x4, offset = 0x4, fixed_abs, tag = 'smem constant byte address 0x4 - core index']
  #allocation1 [shape = 'u32[72,128]{1,0:T(1,128)}', space=vmem, size = 0x9000, scoped, tag = 'internal scratch']
  %s0 = inlined_call_operand.vmem [shape: f32[8,24], index: 0, kind: input, shape index: {}]
  %s1 = inlined_call_operand.vmem [shape: f32[8,24], index: 1, kind: input, shape index: {}]
  %s2 = inlined_call_operand.vmem [shape: f32[8,24], index: 2, kind: input, shape index: {}]
  %s3 = inlined_call_operand.vmem [shape: f32[8,24], index: 3, kind: input, shape index: {}]
  %s4 = inlined_call_operand.vmem [shape: f32[8,24], index: 4, kind: input, shape index: {}]
  %s5 = inlined_call_operand.vmem [shape: f32[8,24], index: 5, kind: input, shape index: {}]
  %s6 = inlined_call_operand.vmem [shape: f32[8,16], index: 6, kind: input, shape index: {}]
  %s7 = inlined_call_operand.vmem [shape: f32[6,24,32], index: 7, kind: input, shape index: {}]
  %s8 = inlined_call_operand.vmem [shape: f32[6,32], index: 8, kind: input, shape index: {}]
  %s9 = inlined_call_operand.vmem [shape: f32[160,64], index: 9, kind: input, shape index: {}]
  %s10 = inlined_call_operand.vmem [shape: f32[1,64], index: 10, kind: input, shape index: {}]
  %s11 = inlined_call_operand.vmem [shape: f32[32,32], index: 11, kind: input, shape index: {}]
  %s12 = inlined_call_operand.vmem [shape: f32[64,32], index: 12, kind: input, shape index: {}]
  %s13 = inlined_call_operand.vmem [shape: f32[16,32], index: 13, kind: input, shape index: {}]
  %s14 = inlined_call_operand.vmem [shape: f32[1,32], index: 14, kind: input, shape index: {}]
  %s15 = inlined_call_operand.hbm [shape: f32[8,32], index: 15, kind: output, shape index: {}]
  %s16 = sld [smem:[#allocation0]]
  $region70: #{tpu_custom_call.1} parent=0
    _
  %s18 = ssub.s32 1, %s16
  %s19 = scalar_select 0, %s18, %s16
  $region1: #{tpu_custom_call.1} parent=0
    #allocation2 [shape = 'u8[4096]{0}', space=vmem, size = 0x1000, scoped, tag = 'output window, operand 0, single buffered']
    #allocation3 [shape = 's32[1]{0}', space=sflag, size = 0x4, scoped, tag = 'scoped memory for tpu_custom_call.1']
    %20 = vsyncpa [#allocation3], 0
    // Predicated region
    $region2: #{tpu_custom_call.1} parent=1 // pred_check
      _
    $region3: #{tpu_custom_call.1} parent=1 // pred_check_branch
      %22 = sbr.rel (0) target = $region5
    $region4: #{tpu_custom_call.1} parent=1 // pred_region
      _
    $region5: #{tpu_custom_call.1} parent=1 // pred_fallthru
      _
    // Predicated region
    $region6: #{tpu_custom_call.1} parent=1 // pred_check
      _
    $region7: #{tpu_custom_call.1} parent=1 // pred_check_branch
      %24 = sbr.rel (0) target = $region9
    $region8: #{tpu_custom_call.1} parent=1 // pred_region
      _
    $region9: #{tpu_custom_call.1} parent=1 // pred_fallthru
      _
    // Predicated region
    $region10: #{tpu_custom_call.1} parent=1 // pred_check
      _
    $region11: #{tpu_custom_call.1} parent=1 // pred_check_branch
      %26 = sbr.rel (0) target = $region13
    $region12: #{tpu_custom_call.1} parent=1 // pred_region
      _
    $region13: #{tpu_custom_call.1} parent=1 // pred_fallthru
      _
    // Predicated region
    $region14: #{tpu_custom_call.1} parent=1 // pred_check
      _
    $region15: #{tpu_custom_call.1} parent=1 // pred_check_branch
      %28 = sbr.rel (0) target = $region17
    $region16: #{tpu_custom_call.1} parent=1 // pred_region
      _
    $region17: #{tpu_custom_call.1} parent=1 // pred_fallthru
      _
    // Predicated region
    $region18: #{tpu_custom_call.1} parent=1 // pred_check
      _
    $region19: #{tpu_custom_call.1} parent=1 // pred_check_branch
      %30 = sbr.rel (0) target = $region21
    $region20: #{tpu_custom_call.1} parent=1 // pred_region
      _
    $region21: #{tpu_custom_call.1} parent=1 // pred_fallthru
      _
    // Predicated region
    $region22: #{tpu_custom_call.1} parent=1 // pred_check
      _
    $region23: #{tpu_custom_call.1} parent=1 // pred_check_branch
      %32 = sbr.rel (0) target = $region25
    $region24: #{tpu_custom_call.1} parent=1 // pred_region
      _
    $region25: #{tpu_custom_call.1} parent=1 // pred_fallthru
      _
    // Predicated region
    $region26: #{tpu_custom_call.1} parent=1 // pred_check
      _
    $region27: #{tpu_custom_call.1} parent=1 // pred_check_branch
      %34 = sbr.rel (0) target = $region29
    $region28: #{tpu_custom_call.1} parent=1 // pred_region
      _
    $region29: #{tpu_custom_call.1} parent=1 // pred_fallthru
      _
    // Predicated region
    $region30: #{tpu_custom_call.1} parent=1 // pred_check
      _
    $region31: #{tpu_custom_call.1} parent=1 // pred_check_branch
      %36 = sbr.rel (0) target = $region33
    $region32: #{tpu_custom_call.1} parent=1 // pred_region
      _
    $region33: #{tpu_custom_call.1} parent=1 // pred_fallthru
      _
    // Predicated region
    $region34: #{tpu_custom_call.1} parent=1 // pred_check
      _
    $region35: #{tpu_custom_call.1} parent=1 // pred_check_branch
      %38 = sbr.rel (0) target = $region37
    $region36: #{tpu_custom_call.1} parent=1 // pred_region
      _
    $region37: #{tpu_custom_call.1} parent=1 // pred_fallthru
      _
    // Predicated region
    $region38: #{tpu_custom_call.1} parent=1 // pred_check
      _
    $region39: #{tpu_custom_call.1} parent=1 // pred_check_branch
      %40 = sbr.rel (0) target = $region41
    $region40: #{tpu_custom_call.1} parent=1 // pred_region
      _
    $region41: #{tpu_custom_call.1} parent=1 // pred_fallthru
      _
    // Predicated region
    $region42: #{tpu_custom_call.1} parent=1 // pred_check
      _
    $region43: #{tpu_custom_call.1} parent=1 // pred_check_branch
      %42 = sbr.rel (0) target = $region45
    $region44: #{tpu_custom_call.1} parent=1 // pred_region
      _
    $region45: #{tpu_custom_call.1} parent=1 // pred_fallthru
      _
    // Predicated region
    $region46: #{tpu_custom_call.1} parent=1 // pred_check
      _
    $region47: #{tpu_custom_call.1} parent=1 // pred_check_branch
      %44 = sbr.rel (0) target = $region49
    $region48: #{tpu_custom_call.1} parent=1 // pred_region
      _
    $region49: #{tpu_custom_call.1} parent=1 // pred_fallthru
      _
    // Predicated region
    $region50: #{tpu_custom_call.1} parent=1 // pred_check
      _
    $region51: #{tpu_custom_call.1} parent=1 // pred_check_branch
      %46 = sbr.rel (0) target = $region53
    $region52: #{tpu_custom_call.1} parent=1 // pred_region
      _
    $region53: #{tpu_custom_call.1} parent=1 // pred_fallthru
      _
    // Predicated region
    $region54: #{tpu_custom_call.1} parent=1 // pred_check
      _
    $region55: #{tpu_custom_call.1} parent=1 // pred_check_branch
      %48 = sbr.rel (0) target = $region57
    $region56: #{tpu_custom_call.1} parent=1 // pred_region
      _
    $region57: #{tpu_custom_call.1} parent=1 // pred_fallthru
      _
    // Predicated region
    $region58: #{tpu_custom_call.1} parent=1 // pred_check
      _
    $region59: #{tpu_custom_call.1} parent=1 // pred_check_branch
      %50 = sbr.rel (0) target = $region61
    $region60: #{tpu_custom_call.1} parent=1 // pred_region
      _
    $region61: #{tpu_custom_call.1} parent=1 // pred_fallthru
      _
    %v51 = vld [vmem:[%s0] sm:$0xff]
    %v52 = vld [vmem:[%s7] sm:$0xff]
    %v53 = vld [vmem:[%s7 + $0x8] sm:$0xff]
    %v54 = vld [vmem:[%s7 + $0x10] sm:$0xff]
    %v55 = vld [vmem:[%s8] sm:$0x1]
    %v56 = vperm.slane %v55, 0
    %vm57 = vcmask 195584
    %v59 = vsel %vm57, %v51, 0
    %61 = vmatpush.msra.mxu0 0.0
    %62 = vmatpush.msra.mxu0 0.0
    %63 = vmatpush.msra.mxu0 0.0
    %64 = vmatpush.msra.mxu0 0.0
    %65 = vmatpush.msra.mxu0 0.0
    %66 = vmatpush.msra.mxu0 0.0
    %67 = vmatpush.msra.mxu0 0.0
    %68 = vmatpush.msra.mxu0 0.0
    %69 = vmatpush.msra.mxu0 0.0
    %70 = vmatpush.msra.mxu0 0.0
    %71 = vmatpush.msra.mxu0 0.0
    %72 = vmatpush.msra.mxu0 0.0
    %73 = vmatpush.msra.mxu0 0.0
    %74 = vmatpush.msra.mxu0 %v54
    %75 = vmatpush.msra.mxu0 %v53
    %76 = vmatpush.msra.mxu0 %v52
    %77 = vmatmul.f32.gmra.mxu0 %v59
    %v78 = vpop.f32.mrf.mxu0
    %v79 = vadd.f32 %v56, %v78
    %80 = vdwg.mxu0
    %v81 = vmax.f32 %v79, 0.0
    %v82 = vld [vmem:[%s1] sm:$0xff]
    %s83 = scalar_lea.vmem %s7, 24
    %v84 = vld [vmem:[%s83] sm:$0xff]
    %v85 = vld [vmem:[%s83 + $0x8] sm:$0xff]
    %v86 = vld [vmem:[%s83 + $0x10] sm:$0xff]
    %v87 = vld [vmem:[%s8 + $0x1] sm:$0x1]
    %v88 = vperm.slane %v87, 0
    %v90 = vsel %vm57, %v82, 0
    %92 = vmatpush.msra.mxu0 0.0
    %93 = vmatpush.msra.mxu0 0.0
    %94 = vmatpush.msra.mxu0 0.0
    %95 = vmatpush.msra.mxu0 0.0
    %96 = vmatpush.msra.mxu0 0.0
    %97 = vmatpush.msra.mxu0 0.0
    %98 = vmatpush.msra.mxu0 0.0
    %99 = vmatpush.msra.mxu0 0.0
    %100 = vmatpush.msra.mxu0 0.0
    %101 = vmatpush.msra.mxu0 0.0
    %102 = vmatpush.msra.mxu0 0.0
    %103 = vmatpush.msra.mxu0 0.0
    %104 = vmatpush.msra.mxu0 0.0
    %105 = vmatpush.msra.mxu0 %v86
    %106 = vmatpush.msra.mxu0 %v85
    %107 = vmatpush.msra.mxu0 %v84
    %108 = vmatmul.f32.gmra.mxu0 %v90
    %v109 = vpop.f32.mrf.mxu0
    %v110 = vadd.f32 %v88, %v109
    %111 = vdwg.mxu0
    %v112 = vmax.f32 %v110, 0.0
    %v113 = vld [vmem:[%s9] sm:$0xff]
    %v114 = vld [vmem:[%s9 + $0x8] sm:$0xff]
    %v115 = vld [vmem:[%s9 + $0x10] sm:$0xff]
    %v116 = vld [vmem:[%s9 + $0x18] sm:$0xff]
    %v117 = vld [vmem:[%s2] sm:$0xff]
    %s118 = scalar_lea.vmem %s7, 48
    %v119 = vld [vmem:[%s118] sm:$0xff]
    %v120 = vld [vmem:[%s118 + $0x8] sm:$0xff]
    %v121 = vld [vmem:[%s118 + $0x10] sm:$0xff]
    %v122 = vld [vmem:[%s8 + $0x2] sm:$0x1]
    %v123 = vperm.slane %v122, 0
    %v125 = vsel %vm57, %v117, 0
    %127 = vmatpush.msra.mxu0 0.0
    %128 = vmatpush.msra.mxu0 0.0
    %129 = vmatpush.msra.mxu0 0.0
    %130 = vmatpush.msra.mxu0 0.0
    %131 = vmatpush.msra.mxu0 0.0
    %132 = vmatpush.msra.mxu0 0.0
    %133 = vmatpush.msra.mxu0 0.0
    %134 = vmatpush.msra.mxu0 0.0
    %135 = vmatpush.msra.mxu0 0.0
    %136 = vmatpush.msra.mxu0 0.0
    %137 = vmatpush.msra.mxu0 0.0
    %138 = vmatpush.msra.mxu0 0.0
    %139 = vmatpush.msra.mxu0 0.0
    %140 = vmatpush.msra.mxu0 %v121
    %141 = vmatpush.msra.mxu0 %v120
    %142 = vmatpush.msra.mxu0 %v119
    %143 = vmatmul.f32.gmra.mxu0 %v125
    %v144 = vpop.f32.mrf.mxu0
    %v145 = vadd.f32 %v123, %v144
    %146 = vdwg.mxu0
    %v147 = vmax.f32 %v145, 0.0
    %v148 = vld [vmem:[%s9 + $0x20] sm:$0xff]
    %v149 = vld [vmem:[%s9 + $0x28] sm:$0xff]
    %v150 = vld [vmem:[%s9 + $0x30] sm:$0xff]
    %v151 = vld [vmem:[%s9 + $0x38] sm:$0xff]
    %vm152 = vcmask 261120
    %v154 = vsel %vm152, %v147, 0
    %156 = vmatpush.msra.mxu0 0.0
    %157 = vmatpush.msra.mxu0 0.0
    %158 = vmatpush.msra.mxu0 0.0
    %159 = vmatpush.msra.mxu0 0.0
    %160 = vmatpush.msra.mxu0 0.0
    %161 = vmatpush.msra.mxu0 0.0
    %162 = vmatpush.msra.mxu0 0.0
    %163 = vmatpush.msra.mxu0 0.0
    %164 = vmatpush.msra.mxu0 0.0
    %165 = vmatpush.msra.mxu0 0.0
    %166 = vmatpush.msra.mxu0 0.0
    %167 = vmatpush.msra.mxu0 0.0
    %168 = vmatpush.msra.mxu0 %v151
    %169 = vmatpush.msra.mxu0 %v150
    %170 = vmatpush.msra.mxu0 %v149
    %171 = vmatpush.msra.mxu0 %v148
    %172 = vmatmul.f32.gmra.mxu0 %v154
    %v173 = vpop.f32.mrf.mxu0
    %v174 = vadd.f32 0.0, %v173
    %175 = vdwg.mxu0
    %v177 = vsel %vm152, %v112, 0
    %179 = vmatpush.msra.mxu0 0.0
    %180 = vmatpush.msra.mxu0 0.0
    %181 = vmatpush.msra.mxu0 0.0
    %182 = vmatpush.msra.mxu0 0.0
    %183 = vmatpush.msra.mxu0 0.0
    %184 = vmatpush.msra.mxu0 0.0
    %185 = vmatpush.msra.mxu0 0.0
    %186 = vmatpush.msra.mxu0 0.0
    %187 = vmatpush.msra.mxu0 0.0
    %188 = vmatpush.msra.mxu0 0.0
    %189 = vmatpush.msra.mxu0 0.0
    %190 = vmatpush.msra.mxu0 0.0
    %191 = vmatpush.msra.mxu0 %v116
    %192 = vmatpush.msra.mxu0 %v115
    %193 = vmatpush.msra.mxu0 %v114
    %194 = vmatpush.msra.mxu0 %v113
    %195 = vmatmul.f32.gmra.mxu0 %v177
    %v196 = vpop.f32.mrf.mxu0
    %v197 = vadd.f32 %v174, %v196
    %198 = vdwg.mxu0
    %v199 = vld [vmem:[%s3] sm:$0xff]
    %s200 = scalar_lea.vmem %s7, 72
    %v201 = vld [vmem:[%s200] sm:$0xff]
    %v202 = vld [vmem:[%s200 + $0x8] sm:$0xff]
    %v203 = vld [vmem:[%s200 + $0x10] sm:$0xff]
    %v204 = vld [vmem:[%s8 + $0x3] sm:$0x1]
    %v205 = vperm.slane %v204, 0
    %v207 = vsel %vm57, %v199, 0
    %209 = vmatpush.msra.mxu0 0.0
    %210 = vmatpush.msra.mxu0 0.0
    %211 = vmatpush.msra.mxu0 0.0
    %212 = vmatpush.msra.mxu0 0.0
    %213 = vmatpush.msra.mxu0 0.0
    %214 = vmatpush.msra.mxu0 0.0
    %215 = vmatpush.msra.mxu0 0.0
    %216 = vmatpush.msra.mxu0 0.0
    %217 = vmatpush.msra.mxu0 0.0
    %218 = vmatpush.msra.mxu0 0.0
    %219 = vmatpush.msra.mxu0 0.0
    %220 = vmatpush.msra.mxu0 0.0
    %221 = vmatpush.msra.mxu0 0.0
    %222 = vmatpush.msra.mxu0 %v203
    %223 = vmatpush.msra.mxu0 %v202
    %224 = vmatpush.msra.mxu0 %v201
    %225 = vmatmul.f32.gmra.mxu0 %v207
    %v226 = vpop.f32.mrf.mxu0
    %v227 = vadd.f32 %v205, %v226
    %228 = vdwg.mxu0
    %v229 = vmax.f32 %v227, 0.0
    %v230 = vld [vmem:[%s9 + $0x40] sm:$0xff]
    %v231 = vld [vmem:[%s9 + $0x48] sm:$0xff]
    %v232 = vld [vmem:[%s9 + $0x50] sm:$0xff]
    %v233 = vld [vmem:[%s9 + $0x58] sm:$0xff]
    %v235 = vsel %vm152, %v229, 0
    %237 = vmatpush.msra.mxu0 0.0
    %238 = vmatpush.msra.mxu0 0.0
    %239 = vmatpush.msra.mxu0 0.0
    %240 = vmatpush.msra.mxu0 0.0
    %241 = vmatpush.msra.mxu0 0.0
    %242 = vmatpush.msra.mxu0 0.0
    %243 = vmatpush.msra.mxu0 0.0
    %244 = vmatpush.msra.mxu0 0.0
    %245 = vmatpush.msra.mxu0 0.0
    %246 = vmatpush.msra.mxu0 0.0
    %247 = vmatpush.msra.mxu0 0.0
    %248 = vmatpush.msra.mxu0 0.0
    %249 = vmatpush.msra.mxu0 %v233
    %250 = vmatpush.msra.mxu0 %v232
    %251 = vmatpush.msra.mxu0 %v231
    %252 = vmatpush.msra.mxu0 %v230
    %253 = vmatmul.f32.gmra.mxu0 %v235
    %v254 = vpop.f32.mrf.mxu0
    %v255 = vadd.f32 0.0, %v254
    %256 = vdwg.mxu0
    %v257 = vadd.f32 %v197, %v255
    %v258 = vld [vmem:[%s4] sm:$0xff]
    %s259 = scalar_lea.vmem %s7, 96
    %v260 = vld [vmem:[%s259] sm:$0xff]
    %v261 = vld [vmem:[%s259 + $0x8] sm:$0xff]
    %v262 = vld [vmem:[%s259 + $0x10] sm:$0xff]
    %v263 = vld [vmem:[%s8 + $0x4] sm:$0x1]
    %v264 = vperm.slane %v263, 0
    %v266 = vsel %vm57, %v258, 0
    %268 = vmatpush.msra.mxu0 0.0
    %269 = vmatpush.msra.mxu0 0.0
    %270 = vmatpush.msra.mxu0 0.0
    %271 = vmatpush.msra.mxu0 0.0
    %272 = vmatpush.msra.mxu0 0.0
    %273 = vmatpush.msra.mxu0 0.0
    %274 = vmatpush.msra.mxu0 0.0
    %275 = vmatpush.msra.mxu0 0.0
    %276 = vmatpush.msra.mxu0 0.0
    %277 = vmatpush.msra.mxu0 0.0
    %278 = vmatpush.msra.mxu0 0.0
    %279 = vmatpush.msra.mxu0 0.0
    %280 = vmatpush.msra.mxu0 0.0
    %281 = vmatpush.msra.mxu0 %v262
    %282 = vmatpush.msra.mxu0 %v261
    %283 = vmatpush.msra.mxu0 %v260
    %284 = vmatmul.f32.gmra.mxu0 %v266
    %v285 = vpop.f32.mrf.mxu0
    %v286 = vadd.f32 %v264, %v285
    %287 = vdwg.mxu0
    %v288 = vmax.f32 %v286, 0.0
    %v289 = vld [vmem:[%s9 + $0x60] sm:$0xff]
    %v290 = vld [vmem:[%s9 + $0x68] sm:$0xff]
    %v291 = vld [vmem:[%s9 + $0x70] sm:$0xff]
    %v292 = vld [vmem:[%s9 + $0x78] sm:$0xff]
    %v294 = vsel %vm152, %v288, 0
    %296 = vmatpush.msra.mxu0 0.0
    %297 = vmatpush.msra.mxu0 0.0
    %298 = vmatpush.msra.mxu0 0.0
    %299 = vmatpush.msra.mxu0 0.0
    %300 = vmatpush.msra.mxu0 0.0
    %301 = vmatpush.msra.mxu0 0.0
    %302 = vmatpush.msra.mxu0 0.0
    %303 = vmatpush.msra.mxu0 0.0
    %304 = vmatpush.msra.mxu0 0.0
    %305 = vmatpush.msra.mxu0 0.0
    %306 = vmatpush.msra.mxu0 0.0
    %307 = vmatpush.msra.mxu0 0.0
    %308 = vmatpush.msra.mxu0 %v292
    %309 = vmatpush.msra.mxu0 %v291
    %310 = vmatpush.msra.mxu0 %v290
    %311 = vmatpush.msra.mxu0 %v289
    %312 = vmatmul.f32.gmra.mxu0 %v294
    %v313 = vpop.f32.mrf.mxu0
    %v314 = vadd.f32 0.0, %v313
    %315 = vdwg.mxu0
    %v316 = vadd.f32 %v257, %v314
    %v317 = vld [vmem:[%s5] sm:$0xff]
    %s318 = scalar_lea.vmem %s7, 120
    %v319 = vld [vmem:[%s318] sm:$0xff]
    %v320 = vld [vmem:[%s318 + $0x8] sm:$0xff]
    %v321 = vld [vmem:[%s318 + $0x10] sm:$0xff]
    %v322 = vld [vmem:[%s8 + $0x5] sm:$0x1]
    %v323 = vperm.slane %v322, 0
    %v325 = vsel %vm57, %v317, 0
    %327 = vmatpush.msra.mxu0 0.0
    %328 = vmatpush.msra.mxu0 0.0
    %329 = vmatpush.msra.mxu0 0.0
    %330 = vmatpush.msra.mxu0 0.0
    %331 = vmatpush.msra.mxu0 0.0
    %332 = vmatpush.msra.mxu0 0.0
    %333 = vmatpush.msra.mxu0 0.0
    %334 = vmatpush.msra.mxu0 0.0
    %335 = vmatpush.msra.mxu0 0.0
    %336 = vmatpush.msra.mxu0 0.0
    %337 = vmatpush.msra.mxu0 0.0
    %338 = vmatpush.msra.mxu0 0.0
    %339 = vmatpush.msra.mxu0 0.0
    %340 = vmatpush.msra.mxu0 %v321
    %341 = vmatpush.msra.mxu0 %v320
    %342 = vmatpush.msra.mxu0 %v319
    %343 = vmatmul.f32.gmra.mxu0 %v325
    %v344 = vpop.f32.mrf.mxu0
    %v345 = vadd.f32 %v323, %v344
    %346 = vdwg.mxu0
    %v347 = vmax.f32 %v345, 0.0
    %v348 = vld [vmem:[%s9 + $0x80] sm:$0xff]
    %v349 = vld [vmem:[%s9 + $0x88] sm:$0xff]
    %v350 = vld [vmem:[%s9 + $0x90] sm:$0xff]
    %v351 = vld [vmem:[%s9 + $0x98] sm:$0xff]
    %v353 = vsel %vm152, %v347, 0
    %355 = vmatpush.msra.mxu0 0.0
    %356 = vmatpush.msra.mxu0 0.0
    %357 = vmatpush.msra.mxu0 0.0
    %358 = vmatpush.msra.mxu0 0.0
    %359 = vmatpush.msra.mxu0 0.0
    %360 = vmatpush.msra.mxu0 0.0
    %361 = vmatpush.msra.mxu0 0.0
    %362 = vmatpush.msra.mxu0 0.0
    %363 = vmatpush.msra.mxu0 0.0
    %364 = vmatpush.msra.mxu0 0.0
    %365 = vmatpush.msra.mxu0 0.0
    %366 = vmatpush.msra.mxu0 0.0
    %367 = vmatpush.msra.mxu0 %v351
    %368 = vmatpush.msra.mxu0 %v350
    %369 = vmatpush.msra.mxu0 %v349
    %370 = vmatpush.msra.mxu0 %v348
    %371 = vmatmul.f32.gmra.mxu0 %v353
    %v372 = vpop.f32.mrf.mxu0
    %v373 = vadd.f32 0.0, %v372
    %374 = vdwg.mxu0
    %v375 = vadd.f32 %v316, %v373
    %v376 = vld [vmem:[%s10] sm:$0x1]
    %v378 = vperm.slane %v376, 0
    %v380 = vadd.f32 %v375, %v378
    %v381 = vmax.f32 %v380, 0.0
    %v382 = vld [vmem:[%s11] sm:$0xff]
    %v383 = vld [vmem:[%s11 + $0x8] sm:$0xff]
    %v384 = vld [vmem:[%s11 + $0x10] sm:$0xff]
    %v385 = vld [vmem:[%s11 + $0x18] sm:$0xff]
    %v386 = vld [vmem:[%s12] sm:$0xff]
    %v387 = vld [vmem:[%s12 + $0x8] sm:$0xff]
    %v388 = vld [vmem:[%s12 + $0x10] sm:$0xff]
    %v389 = vld [vmem:[%s12 + $0x18] sm:$0xff]
    %v390 = vld [vmem:[%s12 + $0x20] sm:$0xff]
    %v391 = vld [vmem:[%s12 + $0x28] sm:$0xff]
    %v392 = vld [vmem:[%s12 + $0x30] sm:$0xff]
    %v393 = vld [vmem:[%s12 + $0x38] sm:$0xff]
    %vm394 = vcmask 523264
    %v396 = vsel %vm394, %v381, 0
    %398 = vmatpush.msra.mxu0 0.0
    %399 = vmatpush.msra.mxu0 0.0
    %400 = vmatpush.msra.mxu0 0.0
    %401 = vmatpush.msra.mxu0 0.0
    %402 = vmatpush.msra.mxu0 0.0
    %403 = vmatpush.msra.mxu0 0.0
    %404 = vmatpush.msra.mxu0 0.0
    %405 = vmatpush.msra.mxu0 0.0
    %406 = vmatpush.msra.mxu0 %v393
    %407 = vmatpush.msra.mxu0 %v392
    %408 = vmatpush.msra.mxu0 %v391
    %409 = vmatpush.msra.mxu0 %v390
    %410 = vmatpush.msra.mxu0 %v389
    %411 = vmatpush.msra.mxu0 %v388
    %412 = vmatpush.msra.mxu0 %v387
    %413 = vmatpush.msra.mxu0 %v386
    %414 = vmatmul.f32.gmra.mxu0 %v396
    %v415 = vpop.f32.mrf.mxu0
    %v416 = vadd.f32 0.0, %v415
    %417 = vdwg.mxu0
    %v419 = vsel %vm152, %v81, 0
    %421 = vmatpush.msra.mxu0 0.0
    %422 = vmatpush.msra.mxu0 0.0
    %423 = vmatpush.msra.mxu0 0.0
    %424 = vmatpush.msra.mxu0 0.0
    %425 = vmatpush.msra.mxu0 0.0
    %426 = vmatpush.msra.mxu0 0.0
    %427 = vmatpush.msra.mxu0 0.0
    %428 = vmatpush.msra.mxu0 0.0
    %429 = vmatpush.msra.mxu0 0.0
    %430 = vmatpush.msra.mxu0 0.0
    %431 = vmatpush.msra.mxu0 0.0
    %432 = vmatpush.msra.mxu0 0.0
    %433 = vmatpush.msra.mxu0 %v385
    %434 = vmatpush.msra.mxu0 %v384
    %435 = vmatpush.msra.mxu0 %v383
    %436 = vmatpush.msra.mxu0 %v382
    %437 = vmatmul.f32.gmra.mxu0 %v419
    %v438 = vpop.f32.mrf.mxu0
    %v439 = vadd.f32 %v416, %v438
    %440 = vdwg.mxu0
    %v441 = vld [vmem:[%s6] sm:$0xff]
    %v442 = vld [vmem:[%s13] sm:$0xff]
    %v443 = vld [vmem:[%s13 + $0x8] sm:$0xff]
    %vm444 = vcmask 130048
    %v446 = vsel %vm444, %v441, 0
    %448 = vmatpush.msra.mxu0 0.0
    %449 = vmatpush.msra.mxu0 0.0
    %450 = vmatpush.msra.mxu0 0.0
    %451 = vmatpush.msra.mxu0 0.0
    %452 = vmatpush.msra.mxu0 0.0
    %453 = vmatpush.msra.mxu0 0.0
    %454 = vmatpush.msra.mxu0 0.0
    %455 = vmatpush.msra.mxu0 0.0
    %456 = vmatpush.msra.mxu0 0.0
    %457 = vmatpush.msra.mxu0 0.0
    %458 = vmatpush.msra.mxu0 0.0
    %459 = vmatpush.msra.mxu0 0.0
    %460 = vmatpush.msra.mxu0 0.0
    %461 = vmatpush.msra.mxu0 0.0
    %462 = vmatpush.msra.mxu0 %v443
    %463 = vmatpush.msra.mxu0 %v442
    %464 = vmatmul.f32.gmra.mxu0 %v446
    %v465 = vpop.f32.mrf.mxu0
    %v466 = vadd.f32 0.0, %v465
    %467 = vdwg.mxu0
    %v468 = vadd.f32 %v439, %v466
    %v469 = vld [vmem:[%s14] sm:$0x1]
    %v471 = vperm.slane %v469, 0
    %v473 = vadd.f32 %v468, %v471
    %v474 = vmax.f32 %v473, 0.0
    %475 = vst.msk [vmem:[#allocation2] sm:$0xff] %vm152, %v474
    // Predicated region
    $region62: #{tpu_custom_call.1} parent=1 // pred_check
      _
    $region63: #{tpu_custom_call.1} parent=1 // pred_check_branch
      %477 = sbr.rel (0) target = $region65
    $region64: #{tpu_custom_call.1} parent=1 // pred_region
      %479 = vsyncadd [#allocation3], 0
      %s481 = sshll.u32 [#allocation2], 4
      %s482 = int_to_ptr.vmem [resolvable:$true] %s481
      %s483 = sshll.u32 %s15, 4
      %s484 = int_to_ptr.hbm [resolvable:$true] %s483
      %486 = dma.vmem_to_hbm [thread:$0]  %s482, 128, %s484, [#allocation3]
    $region65: #{tpu_custom_call.1} parent=1 // pred_fallthru
      _
    // Predicated region
    $region66: #{tpu_custom_call.1} parent=1 // pred_check
      _
    $region67: #{tpu_custom_call.1} parent=1 // pred_check_branch
      %488 = sbr.rel (0) target = $region69
    $region68: #{tpu_custom_call.1} parent=1 // pred_region
      %490 = dma.done [#allocation3], 128
    $region69: #{tpu_custom_call.1} parent=1 // pred_fallthru
      _
    %491 = vsyncpa [#allocation3], 1

</llo_original>
